<compile_context>
chip_gen: v7x
topology: tpu7x:2x2x1
jax: 0.10.0
libtpu: 0.0.40
codegen_flags: <defaults>
</compile_context>

<pallas_src>
import jax
import jax.numpy as jnp
from jax import lax
from jax.experimental import pallas as pl
from jax.experimental.pallas import tpu as pltpu

_EPS = 1e-12          # eps of torch.nn.functional.normalize
_LANE = 128


def _round_up(v, m):
    return (v + m - 1) // m * m


def _vmem_budget_bytes():
    """~75% of physical VMEM (64 MiB on v7x, 128 MiB on v5e/v6e)."""
    cap = 64 * 1024 * 1024
    try:
        info = pltpu.get_tpu_info()
        cap = int(getattr(info, "vmem_capacity_bytes", cap) or cap)
    except Exception:
        pass
    return int(cap * 3 // 4)


def _pick_tile_n(n, d, out_cols, weight_bytes, itemsize, budget):
    """Largest proposal-tile whose double-buffered activations + resident
    weights fit the VMEM budget."""
    def fits(tn):
        return weight_bytes + 2 * tn * (d + out_cols) * itemsize <= budget

    if n <= 1024 and fits(n):
        return n                       # whole problem in one grid step
    for tn in (1024, 512, 256, 128, 64, 32, 16, 8):
        if tn <= n and fits(tn):
            return tn
    return 8


# ----------------------------------------------------------------------------
# Kernels
# ----------------------------------------------------------------------------
def _clip_head_kernel(x_ref, wsc_ref, wbox_ref, bbox_ref, scores_ref, deltas_ref):
    """use_clip_cls_emb=True branch (use_bias=False).

    wsc_ref : (D, KP)  = [normalize(W_cls) ; W_bg]^T / temperature, zero-padded.
    wbox_ref: (D, RP)  = W_bbox^T, zero-padded.
    """
    x = x_ref[...]
    xf = x.astype(jnp.float32)

    # F.normalize(x, p=2, dim=1): 1/max(||x||, eps) via rsqrt (EUP slot, ~free).
    sumsq = jnp.sum(xf * xf, axis=1, keepdims=True)
    inv = lax.rsqrt(jnp.maximum(sumsq, _EPS * _EPS))
    nx = (xf * inv).astype(x.dtype)

    # fused (cls | bg) cosine scores, already divided by temperature (folded
    # into the weights wrapper-side).
    scores = lax.dot_general(nx, wsc_ref[...], (((1,), (0,)), ((), ())),
                             preferred_element_type=jnp.float32)
    scores_ref[...] = scores.astype(scores_ref.dtype)

    # bbox regression on the UN-normalized features, with bias.
    deltas = lax.dot_general(x, wbox_ref[...], (((1,), (0,)), ((), ())),
                             preferred_element_type=jnp.float32)
    deltas_ref[...] = (deltas + bbox_ref[...].astype(jnp.float32)
                       ).astype(deltas_ref.dtype)


def _plain_head_kernel(x_ref, wcls_ref, bcls_ref, wbox_ref, bbox_ref,
                       scores_ref, deltas_ref):
    """use_clip_cls_emb=False branch: two ordinary Linear layers."""
    x = x_ref[...]

    scores = lax.dot_general(x, wcls_ref[...], (((1,), (0,)), ((), ())),
                             preferred_element_type=jnp.float32)
    scores_ref[...] = (scores + bcls_ref[...].astype(jnp.float32)
                       ).astype(scores_ref.dtype)

    deltas = lax.dot_general(x, wbox_ref[...], (((1,), (0,)), ((), ())),
                             preferred_element_type=jnp.float32)
    deltas_ref[...] = (deltas + bbox_ref[...].astype(jnp.float32)
                       ).astype(deltas_ref.dtype)


# ----------------------------------------------------------------------------
# Shared launcher: 1-D grid over proposals, weights resident as full blocks.
# ----------------------------------------------------------------------------
def _launch(kernel, x, params, kp, rp):
    n, d = x.shape
    dt = x.dtype
    itemsize = jnp.dtype(dt).itemsize
    weight_bytes = sum(int(p.size) * jnp.dtype(p.dtype).itemsize for p in params)
    budget = _vmem_budget_bytes()
    tn = _pick_tile_n(n, d, kp + rp, weight_bytes, itemsize, budget)
    grid = (pl.cdiv(n, tn),)

    x_spec = pl.BlockSpec((tn, d), lambda i: (i, 0))
    w_specs = [pl.BlockSpec(p.shape, lambda i: (0, 0)) for p in params]
    out_specs = (pl.BlockSpec((tn, kp), lambda i: (i, 0)),
                 pl.BlockSpec((tn, rp), lambda i: (i, 0)))
    out_shape = (jax.ShapeDtypeStruct((n, kp), dt),
                 jax.ShapeDtypeStruct((n, rp), dt))

    return pl.pallas_call(
        kernel,
        grid=grid,
        in_specs=[x_spec] + w_specs,
        out_specs=out_specs,
        out_shape=out_shape,
        compiler_params=pltpu.CompilerParams(
            dimension_semantics=("parallel",),
            vmem_limit_bytes=budget),
    )(x, *params)


# ----------------------------------------------------------------------------
# Wrappers (weight prep done once in XLA, outputs sliced back to true widths)
# ----------------------------------------------------------------------------
def fastrcnn_clip_forward(x, w_cls, w_bg, w_bbox, b_bbox, temperature):
    """use_clip_cls_emb=True, use_bias=False.  Pass test_cls_score.weight as
    `w_cls` for the openset-test path (same math, different weight)."""
    if x.ndim > 2:
        x = x.reshape(x.shape[0], -1)          # torch.flatten(x, start_dim=1)
    n, d = x.shape
    k = w_cls.shape[0]
    r = w_bbox.shape[0]
    kp = _round_up(k + 1, _LANE)
    rp = _round_up(r, _LANE)
    dt = x.dtype

    # --- one-time weight prep (XLA, not per-tile) ---
    w_norm = jnp.sqrt(jnp.sum(jnp.square(w_cls.astype(jnp.float32)), axis=1,
                              keepdims=True))
    w_cls_n = w_cls.astype(jnp.float32) / jnp.maximum(w_norm, _EPS)
    w_sc = jnp.concatenate([w_cls_n, w_bg.astype(jnp.float32)], axis=0)
    w_sc = w_sc * (1.0 / temperature)                       # fold 1/T
    w_sc_t = jnp.zeros((d, kp), dt).at[:, :k + 1].set(w_sc.T.astype(dt))
    w_box_t = jnp.zeros((d, rp), dt).at[:, :r].set(w_bbox.T.astype(dt))
    b_box_p = jnp.zeros((1, rp), dt).at[:, :r].set(
        b_bbox.reshape(1, r).astype(dt))

    scores_p, deltas_p = _launch(_clip_head_kernel, x,
                                 (w_sc_t, w_box_t, b_box_p), kp, rp)
    return scores_p[:, :k + 1], deltas_p[:, :r]


def fastrcnn_plain_forward(x, w_cls, b_cls, w_bbox, b_bbox):
    """use_clip_cls_emb=False branch."""
    if x.ndim > 2:
        x = x.reshape(x.shape[0], -1)          # torch.flatten(x, start_dim=1)
    n, d = x.shape
    kp1 = w_cls.shape[0]
    r = w_bbox.shape[0]
    kp = _round_up(kp1, _LANE)
    rp = _round_up(r, _LANE)
    dt = x.dtype

    w_cls_t = jnp.zeros((d, kp), dt).at[:, :kp1].set(w_cls.T.astype(dt))
    b_cls_p = jnp.zeros((1, kp), dt).at[:, :kp1].set(
        b_cls.reshape(1, kp1).astype(dt))
    w_box_t = jnp.zeros((d, rp), dt).at[:, :r].set(w_bbox.T.astype(dt))
    b_box_p = jnp.zeros((1, rp), dt).at[:, :r].set(
        b_bbox.reshape(1, r).astype(dt))

    scores_p, deltas_p = _launch(_plain_head_kernel, x,
                                 (w_cls_t, b_cls_p, w_box_t, b_box_p), kp, rp)
    return scores_p[:, :kp1], deltas_p[:, :r]


# ----------------------------------------------------------------------------
# Pure-JAX references (semantics of the PyTorch forward)
# ----------------------------------------------------------------------------
def _ref_clip(x, w_cls, w_bg, w_bbox, b_bbox, temperature):
    x = x.reshape(x.shape[0], -1)
    nx = x / jnp.maximum(jnp.linalg.norm(x, axis=1, keepdims=True), _EPS)
    nw = w_cls / jnp.maximum(jnp.linalg.norm(w_cls, axis=1, keepdims=True), _EPS)
    scores = jnp.concatenate([nx @ nw.T, nx @ w_bg.T], axis=1) / temperature
    deltas = x @ w_bbox.T + b_bbox
    return scores, deltas


def _ref_plain(x, w_cls, b_cls, w_bbox, b_bbox):
    x = x.reshape(x.shape[0], -1)
    return x @ w_cls.T + b_cls, x @ w_bbox.T + b_bbox


# ----------------------------------------------------------------------------
if __name__ == "__main__":
    key = jax.random.PRNGKey(0)
    kx, kxc, kw1, kw2, kw3 = jax.random.split(key, 5)

    # Module config (small, consistent with __init__):
    num_classes = 16
    box_dim = 4                     # len(box2box_transform.weights)
    cls_agnostic_bbox_reg = False
    num_bbox_reg = (1 if cls_agnostic_bbox_reg else num_classes) * box_dim  # 64
    input_size = 32                 # clip text-emb dim / C*H*W of box head
    temperature = 0.01              # openset_test[2]
    n_boxes = 8

    # ---- parameters (mirror the PyTorch inits) ----
    w_cls_clip = jax.random.normal(kw1, (num_classes, input_size), jnp.float32)
    w_bg = jnp.zeros((1, input_size), jnp.float32)          # init'd to 0
    w_cls_plain = 0.01 * jax.random.normal(kw2, (num_classes + 1, input_size),
                                           jnp.float32)
    b_cls_plain = jnp.zeros((num_classes + 1,), jnp.float32)
    w_bbox = 0.001 * jax.random.normal(kw3, (num_bbox_reg, input_size),
                                       jnp.float32)
    b_bbox = jnp.zeros((num_bbox_reg,), jnp.float32)

    # ---- inputs ----
    x_emb = jax.random.normal(kx, (n_boxes, input_size), jnp.float32)     # (N, D)
    x_conv = jax.random.normal(kxc, (n_boxes, 4, 4, 2), jnp.float32)      # → (N, 32)

    # ---- clip-classifier path ----
    scores_c, deltas_c = fastrcnn_clip_forward(
        x_emb, w_cls_clip, w_bg, w_bbox, b_bbox, temperature)
    jax.block_until_ready((scores_c, deltas_c))
    ref_s, ref_d = _ref_clip(x_emb, w_cls_clip, w_bg, w_bbox, b_bbox, temperature)
    assert scores_c.shape == (n_boxes, num_classes + 1)
    assert deltas_c.shape == (n_boxes, num_bbox_reg)
    assert jnp.allclose(scores_c, ref_s, rtol=1e-4, atol=1e-4)
    assert jnp.allclose(deltas_c, ref_d, rtol=1e-4, atol=1e-5)

    # ---- plain linear-classifier path ----
    scores_p, deltas_p = fastrcnn_plain_forward(
        x_conv, w_cls_plain, b_cls_plain, w_bbox, b_bbox)
    jax.block_until_ready((scores_p, deltas_p))
    ref_s2, ref_d2 = _ref_plain(x_conv, w_cls_plain, b_cls_plain, w_bbox, b_bbox)
    assert scores_p.shape == (n_boxes, num_classes + 1)
    assert deltas_p.shape == (n_boxes, num_bbox_reg)
    assert jnp.allclose(scores_p, ref_s2, rtol=1e-4, atol=1e-5)
    assert jnp.allclose(deltas_p, ref_d2, rtol=1e-4, atol=1e-5)

    print("KERNEL_OK")
</pallas_src>

<mosaic_0001>
module attributes {stable_mosaic.version = 11 : i64} {
  func.func @_clip_head_kernel(%arg0: i32, %arg1: memref<8x32xf32, #tpu.memory_space<vmem>>, %arg2: memref<32x128xf32, #tpu.memory_space<vmem>>, %arg3: memref<32x128xf32, #tpu.memory_space<vmem>>, %arg4: memref<1x128xf32, #tpu.memory_space<vmem>>, %arg5: memref<8x128xf32, #tpu.memory_space<vmem>>, %arg6: memref<8x128xf32, #tpu.memory_space<vmem>>) attributes {dimension_semantics = [#tpu.dimension_semantics<parallel>], iteration_bounds = array<i64: 1>, scalar_prefetch = 0 : i64, scratch_operands = 0 : i64, tpu.core_type = #tpu.core_type<tc>, window_params = [{transform_indices = @transform_0, window_bounds = array<i64: 8, 32>}, {pipeline_mode = #tpu.pipeline_mode<synchronous>, transform_indices = @transform_1, window_bounds = array<i64: 32, 128>}, {pipeline_mode = #tpu.pipeline_mode<synchronous>, transform_indices = @transform_2, window_bounds = array<i64: 32, 128>}, {pipeline_mode = #tpu.pipeline_mode<synchronous>, transform_indices = @transform_3, window_bounds = array<i64: 1, 128>}, {transform_indices = @transform_4, window_bounds = array<i64: 8, 128>}, {transform_indices = @transform_5, window_bounds = array<i64: 8, 128>}]} {
    %c0 = arith.constant 0 : index
    %c0_0 = arith.constant 0 : index
    %0 = vector.load %arg1[%c0, %c0_0] : memref<8x32xf32, #tpu.memory_space<vmem>>, vector<8x32xf32>
    %1 = arith.mulf %0, %0 : vector<8x32xf32>
    %cst = arith.constant dense<0.000000e+00> : vector<8xf32>
    %2 = vector.multi_reduction <add>, %1, %cst [1] : vector<8x32xf32> to vector<8xf32>
    %3 = vector.shape_cast %2 : vector<8xf32> to vector<8x1xf32>
    %cst_1 = arith.constant 1.000000e-24 : f32
    %4 = vector.broadcast %cst_1 : f32 to vector<8x1xf32>
    %5 = arith.maximumf %3, %4 : vector<8x1xf32>
    %6 = math.rsqrt %5 : vector<8x1xf32>
    %7 = vector.broadcast %6 : vector<8x1xf32> to vector<8x32xf32>
    %8 = arith.mulf %0, %7 : vector<8x32xf32>
    %c0_2 = arith.constant 0 : index
    %c0_3 = arith.constant 0 : index
    %9 = vector.load %arg2[%c0_2, %c0_3] : memref<32x128xf32, #tpu.memory_space<vmem>>, vector<32x128xf32>
    %cst_4 = arith.constant dense<0.000000e+00> : vector<8x128xf32>
    %10 = tpu.matmul %8, %9, %cst_4 {dimension_numbers = #tpu.dot_dimension_numbers<[1], [0], [0], [1], [0, 0, 1, 1], [], []>} : vector<8x32xf32>, vector<32x128xf32>, vector<8x128xf32> -> vector<8x128xf32>
    %c0_5 = arith.constant 0 : index
    %c0_6 = arith.constant 0 : index
    %11 = vector.load %arg5[%c0_5, %c0_6] : memref<8x128xf32, #tpu.memory_space<vmem>>, vector<8x128xf32>
    tpu.vector_store %arg5[%c0_5, %c0_6], %10 {strides = array<i32>} : memref<8x128xf32, #tpu.memory_space<vmem>>, vector<8x128xf32>,
    %c0_7 = arith.constant 0 : index
    %c0_8 = arith.constant 0 : index
    %12 = vector.load %arg3[%c0_7, %c0_8] : memref<32x128xf32, #tpu.memory_space<vmem>>, vector<32x128xf32>
    %cst_9 = arith.constant dense<0.000000e+00> : vector<8x128xf32>
    %13 = tpu.matmul %0, %12, %cst_9 {dimension_numbers = #tpu.dot_dimension_numbers<[1], [0], [0], [1], [0, 0, 1, 1], [], []>} : vector<8x32xf32>, vector<32x128xf32>, vector<8x128xf32> -> vector<8x128xf32>
    %c0_10 = arith.constant 0 : index
    %c0_11 = arith.constant 0 : index
    %14 = vector.load %arg4[%c0_10, %c0_11] : memref<1x128xf32, #tpu.memory_space<vmem>>, vector<1x128xf32>
    %15 = vector.broadcast %14 : vector<1x128xf32> to vector<8x128xf32>
    %16 = arith.addf %13, %15 : vector<8x128xf32>
    %c0_12 = arith.constant 0 : index
    %c0_13 = arith.constant 0 : index
    %17 = vector.load %arg6[%c0_12, %c0_13] : memref<8x128xf32, #tpu.memory_space<vmem>>, vector<8x128xf32>
    tpu.vector_store %arg6[%c0_12, %c0_13], %16 {strides = array<i32>} : memref<8x128xf32, #tpu.memory_space<vmem>>, vector<8x128xf32>,
    return
  }
  func.func @transform_0(%arg0: i32) -> (i32, i32) {
    %c0_i32 = arith.constant 0 : i32
    %c0_i32_0 = arith.constant 0 : i32
    return %arg0, %c0_i32 : i32, i32
  }
  func.func @transform_1(%arg0: i32) -> (i32, i32) {
    %c0_i32 = arith.constant 0 : i32
    %c0_i32_0 = arith.constant 0 : i32
    %c0_i32_1 = arith.constant 0 : i32
    return %c0_i32, %c0_i32_0 : i32, i32
  }
  func.func @transform_2(%arg0: i32) -> (i32, i32) {
    %c0_i32 = arith.constant 0 : i32
    %c0_i32_0 = arith.constant 0 : i32
    %c0_i32_1 = arith.constant 0 : i32
    return %c0_i32, %c0_i32_0 : i32, i32
  }
  func.func @transform_3(%arg0: i32) -> (i32, i32) {
    %c0_i32 = arith.constant 0 : i32
    %c0_i32_0 = arith.constant 0 : i32
    %c0_i32_1 = arith.constant 0 : i32
    return %c0_i32, %c0_i32_0 : i32, i32
  }
  func.func @transform_4(%arg0: i32) -> (i32, i32) {
    %c0_i32 = arith.constant 0 : i32
    %c0_i32_0 = arith.constant 0 : i32
    return %arg0, %c0_i32 : i32, i32
  }
  func.func @transform_5(%arg0: i32) -> (i32, i32) {
    %c0_i32 = arith.constant 0 : i32
    %c0_i32_0 = arith.constant 0 : i32
    return %arg0, %c0_i32 : i32, i32
  }
}

</mosaic_0001>

<llo_original>
// kernel: tpu_custom_call.1
$region0: #{tpu_custom_call.1}
  #allocation0 [shape = 'u32[]', space=smem, size = 0x4, offset = 0x4, fixed_abs, tag = 'smem constant byte address 0x4 - core index']
  #allocation1 [shape = 'u32[144,128]{1,0:T(1,128)}', space=vmem, size = 0x12000, scoped, tag = 'internal scratch']
  %s0 = inlined_call_operand.hbm [shape: f32[8,32], index: 0, kind: input, shape index: {}]
  %s1 = inlined_call_operand.hbm [shape: f32[32,128], index: 1, kind: input, shape index: {}]
  %s2 = inlined_call_operand.hbm [shape: f32[32,128], index: 2, kind: input, shape index: {}]
  %s3 = inlined_call_operand.vmem [shape: f32[1,128], index: 3, kind: input, shape index: {}]
  %s4 = inlined_call_operand.hbm [shape: f32[8,128], index: 4, kind: output, shape index: {0}]
  %s5 = inlined_call_operand.hbm [shape: f32[8,128], index: 5, kind: output, shape index: {1}]
  %6 = xla_tuple %s4, %s5
  %s7 = sld [smem:[#allocation0]]
  $region46: #{tpu_custom_call.1} parent=0
    _
  %s9 = ssub.s32 1, %s7
  %s10 = scalar_select 0, %s9, %s7
  $region1: #{tpu_custom_call.1} parent=0
    #allocation2 [shape = 'u8[4096]{0}', space=vmem, size = 0x1000, scoped, tag = 'input window, operand 0, single buffered']
    #allocation3 [shape = 's32[1]{0}', space=sflag, size = 0x4, scoped, tag = 'scoped memory for tpu_custom_call.1']
    #allocation4 [shape = 's32[1]{0}', space=sflag, size = 0x4, scoped, tag = 'scoped memory for tpu_custom_call.1']
    #allocation5 [shape = 'u8[16384]{0}', space=vmem, size = 0x4000, scoped, tag = 'input window, operand 1, single buffered']
    #allocation6 [shape = 's32[1]{0}', space=sflag, size = 0x4, scoped, tag = 'scoped memory for tpu_custom_call.1']
    #allocation7 [shape = 'u8[16384]{0}', space=vmem, size = 0x4000, scoped, tag = 'input window, operand 2, single buffered']
    #allocation8 [shape = 'u8[4096]{0}', space=vmem, size = 0x1000, scoped, tag = 'output window, operand 0, single buffered']
    #allocation9 [shape = 'u8[4096]{0}', space=vmem, size = 0x1000, scoped, tag = 'output window, operand 1, single buffered']
    #allocation10 [shape = 's32[1]{0}', space=sflag, size = 0x4, scoped, tag = 'scoped memory for tpu_custom_call.1']
    %11 = vsyncpa [#allocation3], 0
    %12 = vsyncpa [#allocation6], 0
    %13 = vsyncpa [#allocation4], 0
    %14 = vsyncpa [#allocation10], 0
    // Predicated region
    $region2: #{tpu_custom_call.1} parent=1 // pred_check
      _
    $region3: #{tpu_custom_call.1} parent=1 // pred_check_branch
      %16 = sbr.rel (0) target = $region5
    $region4: #{tpu_custom_call.1} parent=1 // pred_region
      %s18 = ssub.s32 128, 128
      %19 = vsyncadd [#allocation3], %s18
      %s21 = sshll.u32 [#allocation2], 4
      %s22 = int_to_ptr.vmem [resolvable:$true] %s21
      %24 = dma.hbm_to_vmem [thread:$0]  %s0, 128, %s22, [#allocation3]
    $region5: #{tpu_custom_call.1} parent=1 // pred_fallthru
      _
    // Predicated region
    $region6: #{tpu_custom_call.1} parent=1 // pred_check
      _
    $region7: #{tpu_custom_call.1} parent=1 // pred_check_branch
      %26 = sbr.rel (0) target = $region9
    $region8: #{tpu_custom_call.1} parent=1 // pred_region
      %s28 = ssub.s32 512, 512
      %29 = vsyncadd [#allocation6], %s28
      %s30 = sshll.u32 [#allocation5], 4
      %s31 = int_to_ptr.vmem [resolvable:$true] %s30
      %36 = dma.hbm_to_vmem [thread:$0]  %s1, 512, %s31, [#allocation6], 128, 128, 8
    $region9: #{tpu_custom_call.1} parent=1 // pred_fallthru
      _
    // Predicated region
    $region10: #{tpu_custom_call.1} parent=1 // pred_check
      _
    $region11: #{tpu_custom_call.1} parent=1 // pred_check_branch
      %38 = sbr.rel (0) target = $region13
    $region12: #{tpu_custom_call.1} parent=1 // pred_region
      %s40 = ssub.s32 512, 512
      %41 = vsyncadd [#allocation6], %s40
      %s42 = sshll.u32 [#allocation7], 4
      %s43 = int_to_ptr.vmem [resolvable:$true] %s42
      %48 = dma.hbm_to_vmem [thread:$0]  %s2, 512, %s43, [#allocation6], 128, 128, 8
    $region13: #{tpu_custom_call.1} parent=1 // pred_fallthru
      _
    // Predicated region
    $region14: #{tpu_custom_call.1} parent=1 // pred_check
      _
    $region15: #{tpu_custom_call.1} parent=1 // pred_check_branch
      %50 = sbr.rel (0) target = $region17
    $region16: #{tpu_custom_call.1} parent=1 // pred_region
      _
    $region17: #{tpu_custom_call.1} parent=1 // pred_fallthru
      _
    // Predicated region
    $region18: #{tpu_custom_call.1} parent=1 // pred_check
      _
    $region19: #{tpu_custom_call.1} parent=1 // pred_check_branch
      %52 = sbr.rel (0) target = $region21
    $region20: #{tpu_custom_call.1} parent=1 // pred_region
      %53 = dma.done [#allocation3], 128
    $region21: #{tpu_custom_call.1} parent=1 // pred_fallthru
      _
    // Predicated region
    $region22: #{tpu_custom_call.1} parent=1 // pred_check
      _
    $region23: #{tpu_custom_call.1} parent=1 // pred_check_branch
      %55 = sbr.rel (0) target = $region25
    $region24: #{tpu_custom_call.1} parent=1 // pred_region
      %56 = dma.done [#allocation6], 512
    $region25: #{tpu_custom_call.1} parent=1 // pred_fallthru
      _
    // Predicated region
    $region26: #{tpu_custom_call.1} parent=1 // pred_check
      _
    $region27: #{tpu_custom_call.1} parent=1 // pred_check_branch
      %58 = sbr.rel (0) target = $region29
    $region28: #{tpu_custom_call.1} parent=1 // pred_region
      %59 = dma.done [#allocation6], 512
    $region29: #{tpu_custom_call.1} parent=1 // pred_fallthru
      _
    %v60 = vld [vmem:[#allocation2] sm:$0xff]
    %v61 = vmul.f32 %v60, %v60
    %vm62 = vcmask 261120
    %v63 = vsel %vm62, %v61, 0.0
    %64 = vadd.xlane.f32.xlu0 %v63
    %v65 = vpop.xlane.xlu0 %64
    %v66 = vmax.f32 %v65, 1e-24
    %v67 = vrsqrt.pop %v66
    %v68 = vmul.f32 %v60, %v67
    %v69 = vld [vmem:[#allocation5] sm:$0xff]
    %v70 = vld [vmem:[#allocation5 + $0x8] sm:$0xff]
    %v71 = vld [vmem:[#allocation5 + $0x10] sm:$0xff]
    %v72 = vld [vmem:[#allocation5 + $0x18] sm:$0xff]
    %v74 = vsel %vm62, %v68, 0
    %76 = vmatprep.subr.mxu0 0.0
    %77 = vmatpush1.msra.mxu0 %v69
    %78 = vmatprep.subr.mxu0 0.0
    %79 = vmatpush1.msra.mxu0 %v70
    %80 = vmatprep.subr.mxu0 0.0
    %81 = vmatpush1.msra.mxu0 %v71
    %82 = vmatprep.subr.mxu0 0.0
    %83 = vmatpush1.msra.mxu0 %v72
    %84 = vmatprep.subr.mxu0 0.0
    %85 = vmatpush1.msra.mxu0 0.0
    %86 = vmatprep.subr.mxu0 0.0
    %87 = vmatpush1.msra.mxu0 0.0
    %88 = vmatprep.subr.mxu0 0.0
    %89 = vmatpush1.msra.mxu0 0.0
    %90 = vmatprep.subr.mxu0 0.0
    %91 = vmatpush1.msra.mxu0 0.0
    %92 = vmatprep.subr.mxu0 0.0
    %93 = vmatpush1.msra.mxu0 0.0
    %94 = vmatprep.subr.mxu0 0.0
    %95 = vmatpush1.msra.mxu0 0.0
    %96 = vmatprep.subr.mxu0 0.0
    %97 = vmatpush1.msra.mxu0 0.0
    %98 = vmatprep.subr.mxu0 0.0
    %99 = vmatpush1.msra.mxu0 0.0
    %100 = vmatprep.subr.mxu0 0.0
    %101 = vmatpush1.msra.mxu0 0.0
    %102 = vmatprep.subr.mxu0 0.0
    %103 = vmatpush1.msra.mxu0 0.0
    %104 = vmatprep.subr.mxu0 0.0
    %105 = vmatpush1.msra.mxu0 0.0
    %106 = vmatprep.subr.mxu0 0.0
    %107 = vmatpush1.msra.mxu0 0.0
    %108 = vmatprep.subr.mxu0 0.0
    %109 = vmatpush1.msra.mxu0 0.0
    %110 = vmatprep.subr.mxu0 0.0
    %111 = vmatpush1.msra.mxu0 0.0
    %112 = vmatprep.subr.mxu0 0.0
    %113 = vmatpush1.msra.mxu0 0.0
    %114 = vmatprep.subr.mxu0 0.0
    %115 = vmatpush1.msra.mxu0 0.0
    %116 = vmatprep.subr.mxu0 0.0
    %117 = vmatpush1.msra.mxu0 0.0
    %118 = vmatprep.subr.mxu0 0.0
    %119 = vmatpush1.msra.mxu0 0.0
    %120 = vmatprep.subr.mxu0 0.0
    %121 = vmatpush1.msra.mxu0 0.0
    %122 = vmatprep.subr.mxu0 0.0
    %123 = vmatpush1.msra.mxu0 0.0
    %124 = vmatprep.subr.mxu0 0.0
    %125 = vmatpush1.msra.mxu0 0.0
    %126 = vmatprep.subr.mxu0 0.0
    %127 = vmatpush1.msra.mxu0 0.0
    %128 = vmatprep.subr.mxu0 0.0
    %129 = vmatpush1.msra.mxu0 0.0
    %130 = vmatprep.subr.mxu0 0.0
    %131 = vmatpush1.msra.mxu0 0.0
    %132 = vmatprep.subr.mxu0 0.0
    %133 = vmatpush1.msra.mxu0 0.0
    %134 = vmatprep.subr.mxu0 0.0
    %135 = vmatpush1.msra.mxu0 0.0
    %136 = vmatprep.subr.mxu0 0.0
    %137 = vmatpush1.msra.mxu0 0.0
    %138 = vmatprep.subr.mxu0 0.0
    %139 = vmatpush1.msra.mxu0 0.0
    %140 = vmatprep.mubr.f32.mxu0 0.0
    %141 = vmatmul.mubr.f32.gmra.mrb[0].mxu0 %v74
    %v142 = vpop.f32.mrb[0].mxu0
    %v143 = vadd.f32 0.0, %v142
    %v144 = vpop.f32.mrb[0].mxu0
    %145 = vdwg.mxu0
    %146 = vst [vmem:[#allocation8] sm:$0xff] %v143
    %v147 = vld [vmem:[#allocation7] sm:$0xff]
    %v148 = vld [vmem:[#allocation7 + $0x8] sm:$0xff]
    %v149 = vld [vmem:[#allocation7 + $0x10] sm:$0xff]
    %v150 = vld [vmem:[#allocation7 + $0x18] sm:$0xff]
    %v151 = vld [vmem:[%s3] sm:$0x1]
    %v153 = vlaneseq
    %v154 = vshrl.u32 %v153, 7
    %v155 = vsub.s32 0, %v154
    %v156 = vrot.slane %v151, %v155
    %v159 = vsel %vm62, %v60, 0
    %161 = vmatprep.subr.mxu0 0.0
    %162 = vmatpush1.msra.mxu0 %v147
    %163 = vmatprep.subr.mxu0 0.0
    %164 = vmatpush1.msra.mxu0 %v148
    %165 = vmatprep.subr.mxu0 0.0
    %166 = vmatpush1.msra.mxu0 %v149
    %167 = vmatprep.subr.mxu0 0.0
    %168 = vmatpush1.msra.mxu0 %v150
    %169 = vmatprep.subr.mxu0 0.0
    %170 = vmatpush1.msra.mxu0 0.0
    %171 = vmatprep.subr.mxu0 0.0
    %172 = vmatpush1.msra.mxu0 0.0
    %173 = vmatprep.subr.mxu0 0.0
    %174 = vmatpush1.msra.mxu0 0.0
    %175 = vmatprep.subr.mxu0 0.0
    %176 = vmatpush1.msra.mxu0 0.0
    %177 = vmatprep.subr.mxu0 0.0
    %178 = vmatpush1.msra.mxu0 0.0
    %179 = vmatprep.subr.mxu0 0.0
    %180 = vmatpush1.msra.mxu0 0.0
    %181 = vmatprep.subr.mxu0 0.0
    %182 = vmatpush1.msra.mxu0 0.0
    %183 = vmatprep.subr.mxu0 0.0
    %184 = vmatpush1.msra.mxu0 0.0
    %185 = vmatprep.subr.mxu0 0.0
    %186 = vmatpush1.msra.mxu0 0.0
    %187 = vmatprep.subr.mxu0 0.0
    %188 = vmatpush1.msra.mxu0 0.0
    %189 = vmatprep.subr.mxu0 0.0
    %190 = vmatpush1.msra.mxu0 0.0
    %191 = vmatprep.subr.mxu0 0.0
    %192 = vmatpush1.msra.mxu0 0.0
    %193 = vmatprep.subr.mxu0 0.0
    %194 = vmatpush1.msra.mxu0 0.0
    %195 = vmatprep.subr.mxu0 0.0
    %196 = vmatpush1.msra.mxu0 0.0
    %197 = vmatprep.subr.mxu0 0.0
    %198 = vmatpush1.msra.mxu0 0.0
    %199 = vmatprep.subr.mxu0 0.0
    %200 = vmatpush1.msra.mxu0 0.0
    %201 = vmatprep.subr.mxu0 0.0
    %202 = vmatpush1.msra.mxu0 0.0
    %203 = vmatprep.subr.mxu0 0.0
    %204 = vmatpush1.msra.mxu0 0.0
    %205 = vmatprep.subr.mxu0 0.0
    %206 = vmatpush1.msra.mxu0 0.0
    %207 = vmatprep.subr.mxu0 0.0
    %208 = vmatpush1.msra.mxu0 0.0
    %209 = vmatprep.subr.mxu0 0.0
    %210 = vmatpush1.msra.mxu0 0.0
    %211 = vmatprep.subr.mxu0 0.0
    %212 = vmatpush1.msra.mxu0 0.0
    %213 = vmatprep.subr.mxu0 0.0
    %214 = vmatpush1.msra.mxu0 0.0
    %215 = vmatprep.subr.mxu0 0.0
    %216 = vmatpush1.msra.mxu0 0.0
    %217 = vmatprep.subr.mxu0 0.0
    %218 = vmatpush1.msra.mxu0 0.0
    %219 = vmatprep.subr.mxu0 0.0
    %220 = vmatpush1.msra.mxu0 0.0
    %221 = vmatprep.subr.mxu0 0.0
    %222 = vmatpush1.msra.mxu0 0.0
    %223 = vmatprep.subr.mxu0 0.0
    %224 = vmatpush1.msra.mxu0 0.0
    %225 = vmatprep.mubr.f32.mxu0 0.0
    %226 = vmatmul.mubr.f32.gmra.mrb[0].mxu0 %v159
    %v227 = vpop.f32.mrb[0].mxu0
    %v228 = vadd.f32 %v156, %v227
    %v229 = vpop.f32.mrb[0].mxu0
    %230 = vdwg.mxu0
    %231 = vst [vmem:[#allocation9] sm:$0xff] %v228
    // Predicated region
    $region30: #{tpu_custom_call.1} parent=1 // pred_check
      _
    $region31: #{tpu_custom_call.1} parent=1 // pred_check_branch
      %233 = sbr.rel (0) target = $region33
    $region32: #{tpu_custom_call.1} parent=1 // pred_region
      %s235 = ssub.s32 128, 128
      %236 = vsyncadd [#allocation4], %s235
      %s238 = sshll.u32 [#allocation8], 4
      %s239 = int_to_ptr.vmem [resolvable:$true] %s238
      %241 = dma.vmem_to_hbm [thread:$0]  %s239, 128, %s4, [#allocation4]
    $region33: #{tpu_custom_call.1} parent=1 // pred_fallthru
      _
    // Predicated region
    $region34: #{tpu_custom_call.1} parent=1 // pred_check
      _
    $region35: #{tpu_custom_call.1} parent=1 // pred_check_branch
      %243 = sbr.rel (0) target = $region37
    $region36: #{tpu_custom_call.1} parent=1 // pred_region
      %s245 = ssub.s32 128, 128
      %246 = vsyncadd [#allocation10], %s245
      %s248 = sshll.u32 [#allocation9], 4
      %s249 = int_to_ptr.vmem [resolvable:$true] %s248
      %251 = dma.vmem_to_hbm [thread:$0]  %s249, 128, %s5, [#allocation10]
    $region37: #{tpu_custom_call.1} parent=1 // pred_fallthru
      _
    // Predicated region
    $region38: #{tpu_custom_call.1} parent=1 // pred_check
      _
    $region39: #{tpu_custom_call.1} parent=1 // pred_check_branch
      %253 = sbr.rel (0) target = $region41
    $region40: #{tpu_custom_call.1} parent=1 // pred_region
      %254 = dma.done [#allocation4], 128
    $region41: #{tpu_custom_call.1} parent=1 // pred_fallthru
      _
    // Predicated region
    $region42: #{tpu_custom_call.1} parent=1 // pred_check
      _
    $region43: #{tpu_custom_call.1} parent=1 // pred_check_branch
      %256 = sbr.rel (0) target = $region45
    $region44: #{tpu_custom_call.1} parent=1 // pred_region
      %257 = dma.done [#allocation10], 128
    $region45: #{tpu_custom_call.1} parent=1 // pred_fallthru
      _
    %258 = vsyncpa [#allocation3], 1
    %259 = vsyncpa [#allocation6], 1
    %260 = vsyncpa [#allocation4], 1
    %261 = vsyncpa [#allocation10], 1

</llo_original>
